<compile_context>
chip_gen: v6e
topology: v6e:2x2x1
jax: 0.10.0
libtpu: 0.0.40
codegen_flags: <defaults>
</compile_context>

<pallas_src>
import functools

import jax
import jax.numpy as jnp
from jax.experimental import pallas as pl
from jax.experimental.pallas import tpu as pltpu


def _project_kernel(x_ref, w_ref, wc_ref, h_ref, c_ref):
    # h = x @ W                      -> [tile_n, H*F]
    # [coeff_i | coeff_j] = x @ Wc   -> [tile_n, 2*H]   (a_i/a_j folded into W)
    x = x_ref[...]
    h_ref[...] = jnp.dot(x, w_ref[...], preferred_element_type=jnp.float32)
    c_ref[...] = jnp.dot(x, wc_ref[...], preferred_element_type=jnp.float32)


def _gat_attention_kernel(ci_ref, cjT_ref, adj_ref, h_ref, bias_ref, out_ref,
                          *, num_heads, negative_slope):
    # ci_ref : [tile_n, H]   coeff_i rows for this destination tile (f32)
    # cjT_ref: [H, N]        coeff_j in row layout, resident (f32)
    # adj_ref: [tile_n, N]   adjacency rows (bf16; exact for 0/1 masks)
    # h_ref  : [H, N, F]     projected features, head-major, resident (bf16)
    # out_ref: [tile_n, H*F]
    adj = adj_ref[...].astype(jnp.float32)

    outs = []
    for head in range(num_heads):              # H is tiny and static
        ci = ci_ref[:, head:head + 1]          # [tile_n, 1]
        cj = cjT_ref[head:head + 1, :]         # [1, N]
        c = ci + cj                            # [tile_n, N]
        e = jnp.where(c >= 0, c, negative_slope * c)      # LeakyReLU
        # Faithful to the torch code: mask by multiplying BEFORE softmax
        # (non-edges contribute exp(-max) to the denominator), then zero
        # non-edges again after softmax.
        logits = e * adj
        m = jnp.max(logits, axis=-1, keepdims=True)
        p = jnp.exp(logits - m)
        s = jnp.sum(p, axis=-1, keepdims=True)
        att = (p * pl.reciprocal(s, approx=True)) * adj
        # TODO(synk): attention dropout is identity here (eval / training=False).
        # Dominant matmul: bf16 operands, f32 accumulation; h_ref[head] is a
        # contiguous [N, F] slab (no lane slicing).
        outs.append(jnp.dot(att.astype(jnp.bfloat16), h_ref[head],
                            preferred_element_type=jnp.float32))

    # Single lane-dense [tile_n, H*F] store (+ bias).
    out_ref[...] = jnp.concatenate(outs, axis=-1) + bias_ref[...]


def _pick_tile_n(N, tile_n):
    """Row-tile size: multiple of 8 dividing N, <= 256, preferring >= 2 tiles
    (so the parallel grid axis can use both v7x TensorCores)."""
    if tile_n is not None and (tile_n == N or (N % tile_n == 0 and tile_n % 8 == 0)):
        return tile_n
    best = N
    t = 8
    while t <= min(N // 2, 256):
        if N % t == 0:
            best = t
        t += 8
    return best


def _vmem_limit_bytes(tile_n, N, hf, num_heads, out_features):
    """Rough attention-call working set (with default 2x buffering), clamped to
    [32 MiB, 64 MiB] so it is safe on every generation (v7x physical = 64 MiB)."""
    pad = lambda v: ((v + 127) // 128) * 128
    adj_bytes = 2 * tile_n * pad(N) * 2                       # bf16 adj tile, 2x buf
    out_bytes = 2 * tile_n * pad(hf) * 4
    h_bytes = 2 * num_heads * N * pad(out_features) * 2       # resident bf16 h, 2x buf
    tmp_bytes = 6 * tile_n * pad(N) * 4                       # softmax temporaries
    need = 2 * (adj_bytes + out_bytes + h_bytes + tmp_bytes)
    return int(min(max(need, 32 * 1024 * 1024), 64 * 1024 * 1024))


def gat_forward(x, W, a_i, a_j, adj, bias, *, negative_slope=0.2, tile_n=None):
    N, in_features = x.shape
    num_heads, out_features = a_i.shape
    hf = num_heads * out_features

    tile_n = _pick_tile_n(N, tile_n)
    num_tiles = N // tile_n

    # Fold a_i / a_j into W (host-side layout plumbing, done once):
    #   blockdiag(a_i) : [H*F, H] so that  (x @ W) @ blockdiag(a_i) == x @ (W @ blockdiag(a_i)).
    eye = jnp.eye(num_heads, dtype=jnp.float32)
    Ai = (a_i[:, :, None] * eye[:, None, :]).reshape(hf, num_heads)   # [H*F, H]
    Aj = (a_j[:, :, None] * eye[:, None, :]).reshape(hf, num_heads)   # [H*F, H]
    Wc = jnp.concatenate([W @ Ai, W @ Aj], axis=-1)                   # [in, 2H]

    params = pltpu.CompilerParams(
        dimension_semantics=("parallel",),
        vmem_limit_bytes=_vmem_limit_bytes(tile_n, N, hf, num_heads, out_features))

    # 1) Projection + hoisted attention coefficients, tiled over node rows.
    h, c = pl.pallas_call(
        _project_kernel,
        out_shape=(jax.ShapeDtypeStruct((N, hf), jnp.float32),
                   jax.ShapeDtypeStruct((N, 2 * num_heads), jnp.float32)),
        grid=(num_tiles,),
        in_specs=[pl.BlockSpec((tile_n, in_features), lambda i: (i, 0)),
                  pl.BlockSpec((in_features, hf), lambda i: (0, 0)),
                  pl.BlockSpec((in_features, 2 * num_heads), lambda i: (0, 0))],
        out_specs=(pl.BlockSpec((tile_n, hf), lambda i: (i, 0)),
                   pl.BlockSpec((tile_n, 2 * num_heads), lambda i: (i, 0))),
        compiler_params=params,
    )(x, W, Wc)

    # Wrapper-side layout plumbing (cheap, one-time):
    coeff_i = c[:, :num_heads]                                        # [N, H]
    coeff_jT = c[:, num_heads:].T                                     # [H, N]
    h_hm = jnp.transpose(h.reshape(N, num_heads, out_features),
                         (1, 0, 2)).astype(jnp.bfloat16)              # [H, N, F]
    adj_c = adj.astype(jnp.bfloat16)   # exact for 0/1 communication masks

    # 2) Attention + aggregation, tiled over destination-node rows.
    kernel = functools.partial(
        _gat_attention_kernel,
        num_heads=num_heads,
        negative_slope=float(negative_slope),
    )
    out = pl.pallas_call(
        kernel,
        out_shape=jax.ShapeDtypeStruct((N, hf), jnp.float32),
        grid=(num_tiles,),
        in_specs=[pl.BlockSpec((tile_n, num_heads), lambda i: (i, 0)),          # coeff_i rows
                  pl.BlockSpec((num_heads, N), lambda i: (0, 0)),               # coeff_j^T (resident)
                  pl.BlockSpec((tile_n, N), lambda i: (i, 0)),                  # adj rows (bf16)
                  pl.BlockSpec((num_heads, N, out_features),
                               lambda i: (0, 0, 0)),                            # h head-major (resident)
                  pl.BlockSpec((1, hf), lambda i: (0, 0))],                     # bias
        out_specs=pl.BlockSpec((tile_n, hf), lambda i: (i, 0)),
        compiler_params=params,
    )(coeff_i, coeff_jT, adj_c, h_hm, bias.reshape(1, hf))
    return out


def gat_reference(x, W, a_i, a_j, adj, bias, *, negative_slope=0.2):
    """Plain-JAX mirror of the PyTorch forward (for verification)."""
    num_heads, out_features = a_i.shape
    N = x.shape[0]
    h = (x @ W).reshape(N, num_heads, out_features)
    outs = []
    for head in range(num_heads):
        hh = h[:, head, :]
        ci = hh @ a_i[head][:, None]          # [N,1]
        cj = hh @ a_j[head][:, None]          # [N,1]
        coeff = ci + cj.T
        e = jnp.where(coeff >= 0, coeff, negative_slope * coeff)
        att = e * adj
        att = jax.nn.softmax(att, axis=1)
        att = att * adj
        outs.append(att @ hh)
    out = jnp.concatenate(outs, axis=-1)
    return out + bias[None, :]


if __name__ == "__main__":
    # Small deterministic problem consistent with the module's forward:
    # N agents, each with in_features input features.
    N = 64
    in_features = 16
    out_features = 32
    num_heads = 2
    negative_slope = 0.2
    gain = 2.0 ** 0.5  # nn.init.calculate_gain('relu')

    key = jax.random.PRNGKey(0)
    kx, kadj, kw, kai, kaj = jax.random.split(key, 5)

    # Xavier-normal stds matching reset_parameters()
    std_W = gain * (2.0 / (in_features + num_heads * out_features)) ** 0.5
    std_a = gain * (2.0 / (out_features + num_heads)) ** 0.5  # torch shape (H, F, 1)

    W = std_W * jax.random.normal(kw, (in_features, num_heads * out_features), jnp.float32)
    a_i = std_a * jax.random.normal(kai, (num_heads, out_features), jnp.float32)
    a_j = std_a * jax.random.normal(kaj, (num_heads, out_features), jnp.float32)
    # TODO(synk): torch stores bias as float64; kept float32 here (zeros, numerically identical).
    bias = jnp.zeros((num_heads * out_features,), jnp.float32)

    x = jax.random.normal(kx, (N, in_features), jnp.float32)
    adj = jax.random.bernoulli(kadj, 0.5, (N, N)).astype(jnp.float32)

    out = gat_forward(x, W, a_i, a_j, adj, bias,
                      negative_slope=negative_slope, tile_n=32)
    out = jax.block_until_ready(out)

    ref = gat_reference(x, W, a_i, a_j, adj, bias, negative_slope=negative_slope)
    assert out.shape == (N, num_heads * out_features)
    err = float(jnp.max(jnp.abs(out - ref)))
    assert jnp.allclose(out, ref, atol=1e-2, rtol=1e-2), err

    print("KERNEL_OK")
</pallas_src>

<mosaic_0001>
module attributes {stable_mosaic.version = 11 : i64} {
  func.func @_project_kernel(%arg0: i32, %arg1: memref<32x16xf32, #tpu.memory_space<vmem>>, %arg2: memref<16x64xf32, #tpu.memory_space<vmem>>, %arg3: memref<16x4xf32, #tpu.memory_space<vmem>>, %arg4: memref<32x64xf32, #tpu.memory_space<vmem>>, %arg5: memref<32x4xf32, #tpu.memory_space<vmem>>) attributes {dimension_semantics = [#tpu.dimension_semantics<parallel>], iteration_bounds = array<i64: 2>, scalar_prefetch = 0 : i64, scratch_operands = 0 : i64, tpu.core_type = #tpu.core_type<tc>, window_params = [{transform_indices = @transform_0, window_bounds = array<i64: 32, 16>}, {pipeline_mode = #tpu.pipeline_mode<synchronous>, transform_indices = @transform_1, window_bounds = array<i64: 16, 64>}, {pipeline_mode = #tpu.pipeline_mode<synchronous>, transform_indices = @transform_2, window_bounds = array<i64: 16, 4>}, {transform_indices = @transform_3, window_bounds = array<i64: 32, 64>}, {transform_indices = @transform_4, window_bounds = array<i64: 32, 4>}]} {
    %c0 = arith.constant 0 : index
    %c0_0 = arith.constant 0 : index
    %0 = vector.load %arg1[%c0, %c0_0] : memref<32x16xf32, #tpu.memory_space<vmem>>, vector<32x16xf32>
    %c0_1 = arith.constant 0 : index
    %c0_2 = arith.constant 0 : index
    %1 = vector.load %arg2[%c0_1, %c0_2] : memref<16x64xf32, #tpu.memory_space<vmem>>, vector<16x64xf32>
    %cst = arith.constant dense<0.000000e+00> : vector<32x64xf32>
    %2 = tpu.matmul %0, %1, %cst {dimension_numbers = #tpu.dot_dimension_numbers<[1], [0], [0], [1], [0, 0, 1, 1], [], []>} : vector<32x16xf32>, vector<16x64xf32>, vector<32x64xf32> -> vector<32x64xf32>
    %c0_3 = arith.constant 0 : index
    %c0_4 = arith.constant 0 : index
    %3 = vector.load %arg4[%c0_3, %c0_4] : memref<32x64xf32, #tpu.memory_space<vmem>>, vector<32x64xf32>
    tpu.vector_store %arg4[%c0_3, %c0_4], %2 {strides = array<i32>} : memref<32x64xf32, #tpu.memory_space<vmem>>, vector<32x64xf32>,
    %c0_5 = arith.constant 0 : index
    %c0_6 = arith.constant 0 : index
    %4 = vector.load %arg3[%c0_5, %c0_6] : memref<16x4xf32, #tpu.memory_space<vmem>>, vector<16x4xf32>
    %cst_7 = arith.constant dense<0.000000e+00> : vector<32x4xf32>
    %5 = tpu.matmul %0, %4, %cst_7 {dimension_numbers = #tpu.dot_dimension_numbers<[1], [0], [0], [1], [0, 0, 1, 1], [], []>} : vector<32x16xf32>, vector<16x4xf32>, vector<32x4xf32> -> vector<32x4xf32>
    %c0_8 = arith.constant 0 : index
    %c0_9 = arith.constant 0 : index
    %6 = vector.load %arg5[%c0_8, %c0_9] : memref<32x4xf32, #tpu.memory_space<vmem>>, vector<32x4xf32>
    tpu.vector_store %arg5[%c0_8, %c0_9], %5 {strides = array<i32>} : memref<32x4xf32, #tpu.memory_space<vmem>>, vector<32x4xf32>,
    return
  }
  func.func @transform_0(%arg0: i32) -> (i32, i32) {
    %c0_i32 = arith.constant 0 : i32
    %c0_i32_0 = arith.constant 0 : i32
    return %arg0, %c0_i32 : i32, i32
  }
  func.func @transform_1(%arg0: i32) -> (i32, i32) {
    %c0_i32 = arith.constant 0 : i32
    %c0_i32_0 = arith.constant 0 : i32
    %c0_i32_1 = arith.constant 0 : i32
    return %c0_i32, %c0_i32_0 : i32, i32
  }
  func.func @transform_2(%arg0: i32) -> (i32, i32) {
    %c0_i32 = arith.constant 0 : i32
    %c0_i32_0 = arith.constant 0 : i32
    %c0_i32_1 = arith.constant 0 : i32
    return %c0_i32, %c0_i32_0 : i32, i32
  }
  func.func @transform_3(%arg0: i32) -> (i32, i32) {
    %c0_i32 = arith.constant 0 : i32
    %c0_i32_0 = arith.constant 0 : i32
    return %arg0, %c0_i32 : i32, i32
  }
  func.func @transform_4(%arg0: i32) -> (i32, i32) {
    %c0_i32 = arith.constant 0 : i32
    %c0_i32_0 = arith.constant 0 : i32
    return %arg0, %c0_i32 : i32, i32
  }
}

</mosaic_0001>

<llo_original>
// kernel: tpu_custom_call.1
$region0: #{tpu_custom_call.1}
  #allocation0 [shape = 'u32[]', space=smem, size = 0x4, offset = 0x4, fixed_abs, tag = 'smem constant byte address 0x4 - core index']
  #allocation1 [shape = 'u32[144,128]{1,0:T(1,128)}', space=vmem, size = 0x12000, scoped, tag = 'internal scratch']
  %s0 = inlined_call_operand.vmem [shape: f32[64,16], index: 0, kind: input, shape index: {}]
  %s1 = inlined_call_operand.vmem [shape: f32[16,64], index: 1, kind: input, shape index: {}]
  %s2 = inlined_call_operand.vmem [shape: f32[16,4], index: 2, kind: input, shape index: {}]
  %s3 = inlined_call_operand.hbm [shape: f32[64,64], index: 3, kind: output, shape index: {0}]
  %s4 = inlined_call_operand.vmem [shape: f32[64,4], index: 4, kind: output, shape index: {1}]
  %5 = xla_tuple %s3, %s4
  %s6 = sld [smem:[#allocation0]]
  $region53: #{tpu_custom_call.1} parent=0
    _
  %s8 = ssub.s32 1, %s6
  %s9 = scalar_select 0, %s8, %s6
  $region1: #{tpu_custom_call.1} parent=0
    #allocation2 [shape = 'u8[32768]{0}', space=vmem, size = 0x8000, scoped, tag = 'output window, operand 0']
    #allocation3 [shape = 's32[2]{0}', space=sflag, size = 0x8, scoped, tag = 'scoped memory for tpu_custom_call.1']
    %10 = vsyncpa [#allocation3], 0
    %s11 = scalar_lea.sflag [#allocation3], 1
    %12 = vsyncpa %s11, 0
    loop: start=0, step=1, limit=4
    $region2: #{tpu_custom_call.1} parent=1 // loop_pre_header
      _
    $region3: #{tpu_custom_call.1} parent=1 // loop_header
      %s14 = sphi 0, %s18
      %p15 = scmp.ge.s32.totalorder %s14, 4
      %s24 = sphi 0, %s26
      %s27 = sphi 0, %s24
      %s28 = sphi 0, %s27
      %s44 = sphi 0, %s28
      %s48 = sphi 0, %s48
      %s50 = sphi 0, %s48
      %s51 = sphi 0, %s50
      %s65 = sphi 0, %s51
      %s69 = sphi 0, %s69
      %s71 = sphi 0, %s69
      %s72 = sphi 0, %s71
      %s86 = sphi 0, %s72
      %s92 = sphi 0, %s94
      %s95 = sphi 0, %s92
      %s96 = sphi 0, %s95
      %s112 = sphi 0, %s96
      %s118 = sphi 0, %s120
      %s121 = sphi 0, %s118
      %s122 = sphi 0, %s121
      %s138 = sphi 0, %s122
    $region4: #{tpu_custom_call.1} parent=1 // loop_header_branch
      %17 = sbr.rel (%p15) target = $region8
    $region5: #{tpu_custom_call.1} parent=1 // loop_body
      %s19 = ssub.s32 %s14, 1
      %s20 = ssub.s32 %s14, 2
      %s21 = sadd.s32 %s14, 1
      %s22 = ssub.s32 %s14, %s21
      %p23 = scmp.eq.s32.totalorder %s22, 0
      %s25 = sadd.s32 %s24, 1
      %s26 = scalar_select %p23, %s24, %s25
      %p29 = pneg %p23
      %p30 = scmp.eq.s32.totalorder %s14, 1
      %p31 = por %p29, %p30
      %p32 = scmp.ne.s32.totalorder %s24, %s27
      %p33 = scmp.eq.s32.totalorder %s14, 0
      %p34 = por %p32, %p33
      %p35 = scmp.ne.s32.totalorder %s24, %s27
      %p36 = scmp.eq.s32.totalorder %s19, 1
      %p37 = por %p35, %p36
      %p38 = scmp.ne.s32.totalorder %s27, %s28
      %p39 = scmp.eq.s32.totalorder %s19, 0
      %p40 = por %p38, %p39
      %p41 = scmp.ne.s32.totalorder %s27, %s28
      %p42 = scmp.eq.s32.totalorder %s20, 1
      %p43 = por %p41, %p42
      %p45 = scmp.ne.s32.totalorder %s28, %s44
      %p46 = scmp.eq.s32.totalorder %s20, 0
      %p47 = por %p45, %p46
      %s49 = sadd.s32 %s48, 1
      %p52 = scmp.eq.s32.totalorder %s14, 1
      %p53 = scmp.ne.s32.totalorder %s48, %s50
      %p54 = scmp.eq.s32.totalorder %s14, 0
      %p55 = por %p53, %p54
      %p56 = scmp.ne.s32.totalorder %s48, %s50
      %p57 = scmp.eq.s32.totalorder %s19, 1
      %p58 = por %p56, %p57
      %p59 = scmp.ne.s32.totalorder %s50, %s51
      %p60 = scmp.eq.s32.totalorder %s19, 0
      %p61 = por %p59, %p60
      %p62 = scmp.ne.s32.totalorder %s50, %s51
      %p63 = scmp.eq.s32.totalorder %s20, 1
      %p64 = por %p62, %p63
      %p66 = scmp.ne.s32.totalorder %s51, %s65
      %p67 = scmp.eq.s32.totalorder %s20, 0
      %p68 = por %p66, %p67
      %s70 = sadd.s32 %s69, 1
      %p73 = scmp.eq.s32.totalorder %s14, 1
      %p74 = scmp.ne.s32.totalorder %s69, %s71
      %p75 = scmp.eq.s32.totalorder %s14, 0
      %p76 = por %p74, %p75
      %p77 = scmp.ne.s32.totalorder %s69, %s71
      %p78 = scmp.eq.s32.totalorder %s19, 1
      %p79 = por %p77, %p78
      %p80 = scmp.ne.s32.totalorder %s71, %s72
      %p81 = scmp.eq.s32.totalorder %s19, 0
      %p82 = por %p80, %p81
      %p83 = scmp.ne.s32.totalorder %s71, %s72
      %p84 = scmp.eq.s32.totalorder %s20, 1
      %p85 = por %p83, %p84
      %p87 = scmp.ne.s32.totalorder %s72, %s86
      %p88 = scmp.eq.s32.totalorder %s20, 0
      %p89 = por %p87, %p88
      %s90 = ssub.s32 %s14, %s21
      %p91 = scmp.eq.s32.totalorder %s90, 0
      %s93 = sadd.s32 %s92, 1
      %s94 = scalar_select %p91, %s92, %s93
      %p97 = pneg %p91
      %p98 = scmp.eq.s32.totalorder %s14, 1
      %p99 = por %p97, %p98
      %p100 = scmp.ne.s32.totalorder %s92, %s95
      %p101 = scmp.eq.s32.totalorder %s14, 0
      %p102 = por %p100, %p101
      %p103 = scmp.ne.s32.totalorder %s92, %s95
      %p104 = scmp.eq.s32.totalorder %s19, 1
      %p105 = por %p103, %p104
      %p106 = scmp.ne.s32.totalorder %s95, %s96
      %p107 = scmp.eq.s32.totalorder %s19, 0
      %p108 = por %p106, %p107
      %p109 = scmp.ne.s32.totalorder %s95, %s96
      %p110 = scmp.eq.s32.totalorder %s20, 1
      %p111 = por %p109, %p110
      %p113 = scmp.ne.s32.totalorder %s96, %s112
      %p114 = scmp.eq.s32.totalorder %s20, 0
      %p115 = por %p113, %p114
      %s116 = ssub.s32 %s14, %s21
      %p117 = scmp.eq.s32.totalorder %s116, 0
      %s119 = sadd.s32 %s118, 1
      %s120 = scalar_select %p117, %s118, %s119
      %p123 = pneg %p117
      %p124 = scmp.eq.s32.totalorder %s14, 1
      %p125 = por %p123, %p124
      %p126 = scmp.ne.s32.totalorder %s118, %s121
      %p127 = scmp.eq.s32.totalorder %s14, 0
      %p128 = por %p126, %p127
      %p129 = scmp.ne.s32.totalorder %s118, %s121
      %p130 = scmp.eq.s32.totalorder %s19, 1
      %p131 = por %p129, %p130
      %p132 = scmp.ne.s32.totalorder %s121, %s122
      %p133 = scmp.eq.s32.totalorder %s19, 0
      %p134 = por %p132, %p133
      %p135 = scmp.ne.s32.totalorder %s121, %s122
      %p136 = scmp.eq.s32.totalorder %s20, 1
      %p137 = por %p135, %p136
      %p139 = scmp.ne.s32.totalorder %s122, %s138
      %p140 = scmp.eq.s32.totalorder %s20, 0
      %p141 = por %p139, %p140
      %p142 = scmp.le.s32.totalorder 1, %s14
      %p143 = scmp.lt.s32.totalorder %s14, 3
      %p144 = pnand %p142, %p143
      %p145 = pneg %p144
      // Predicated region
      $region9: #{tpu_custom_call.1} parent=5 // pred_check
        _
      $region10: #{tpu_custom_call.1} parent=5 // pred_check_branch
        %147 = sbr.rel (%p144) target = $region12
      $region11: #{tpu_custom_call.1} parent=5 // pred_region
        %s148 = ssub.s32 %s14, 1
        // Predicated region
        $region13: #{tpu_custom_call.1} parent=11 // pred_check
          %p149 = pneg %p61
        $region14: #{tpu_custom_call.1} parent=11 // pred_check_branch
          %151 = sbr.rel (%p149) target = $region16
        $region15: #{tpu_custom_call.1} parent=11 // pred_region
          _
        $region16: #{tpu_custom_call.1} parent=11 // pred_fallthru
          _
        // Predicated region
        $region17: #{tpu_custom_call.1} parent=11 // pred_check
          %p152 = pneg %p82
        $region18: #{tpu_custom_call.1} parent=11 // pred_check_branch
          %154 = sbr.rel (%p152) target = $region20
        $region19: #{tpu_custom_call.1} parent=11 // pred_region
          _
        $region20: #{tpu_custom_call.1} parent=11 // pred_fallthru
          _
      $region12: #{tpu_custom_call.1} parent=5 // pred_fallthru
        _
      %p155 = scmp.lt.s32.totalorder %s14, 2
      // Predicated region
      $region21: #{tpu_custom_call.1} parent=5 // pred_check
        %p156 = pneg %p155
      $region22: #{tpu_custom_call.1} parent=5 // pred_check_branch
        %158 = sbr.rel (%p156) target = $region24
      $region23: #{tpu_custom_call.1} parent=5 // pred_region
        // Predicated region
        $region25: #{tpu_custom_call.1} parent=23 // pred_check
          %p159 = pneg %p34
        $region26: #{tpu_custom_call.1} parent=23 // pred_check_branch
          %161 = sbr.rel (%p159) target = $region28
        $region27: #{tpu_custom_call.1} parent=23 // pred_region
          %s162 = smul.u32 4, %s14
          %p163 = scmp.lt.s32.totalorder %s162, 7
          %s164 = scalar_select %p163, %s162, 7
          %s165 = smul.addr %s164, 8
          %s166 = scalar_lea.vmem %s0, %s165
          %s167 = smul.u32 4, %s14
        $region28: #{tpu_custom_call.1} parent=23 // pred_fallthru
          _
      $region24: #{tpu_custom_call.1} parent=5 // pred_fallthru
        _
      %p168 = scmp.le.s32.totalorder 1, %s14
      %p169 = scmp.lt.s32.totalorder %s14, 3
      %p170 = pnand %p168, %p169
      %p171 = pneg %p170
      // Predicated region
      $region29: #{tpu_custom_call.1} parent=5 // pred_check
        _
      $region30: #{tpu_custom_call.1} parent=5 // pred_check_branch
        %173 = sbr.rel (%p170) target = $region32
      $region31: #{tpu_custom_call.1} parent=5 // pred_region
        %s174 = ssub.s32 %s14, 1
        %s175 = smul.u32 4, %s19
        %p176 = scmp.lt.s32.totalorder %s175, 7
        %s177 = scalar_select %p176, %s175, 7
        %s178 = smul.addr %s177, 8
        %s179 = scalar_lea.vmem %s0, %s178
        %p180 = pneg %p40
        %p181 = pneg %p37
        %p182 = pneg %p61
        %p183 = pneg %p58
        %p184 = pneg %p82
        %p185 = pneg %p79
        %p186 = pneg %p108
        %p187 = pneg %p105
        %s188 = sand.u32 %s95, 1
        %s189 = scalar_lea.sflag [#allocation3], %s188
        %s190 = sand.u32 %s95, 1
        %s191 = smul.addr %s190, 32
        %s192 = scalar_lea.vmem [#allocation2], %s191
        %p193 = pneg %p134
        %p194 = pneg %p131
        %s195 = smul.u32 4, %s19
        %p196 = scmp.lt.s32.totalorder %s195, 7
        %s197 = scalar_select %p196, %s195, 7
        %s198 = smul.addr %s197, 8
        %s199 = scalar_lea.vmem %s4, %s198
        %s200 = smul.u32 4, %s19
        %p201 = scmp.lt.s32.totalorder %s200, 7
        %s202 = scalar_select %p201, %s200, 7
        %s203 = smul.addr %s202, 8
        %s204 = scalar_lea.vmem %s0, %s203
        %s205 = smul.u32 4, %s19
        %s206 = smul.u32 4, %s19
        %s207 = smul.u32 4, %s19
        %p208 = scmp.lt.s32.totalorder %s207, 7
        %s209 = scalar_select %p208, %s207, 7
        %s210 = smul.addr %s209, 8
        %s211 = scalar_lea.vmem %s4, %s210
        %s212 = smul.u32 4, %s19
        %v213 = vld [vmem:[%s204] sm:$0xff]
        %v214 = vld [vmem:[%s204 + $0x8] sm:$0xff]
        %v215 = vld [vmem:[%s204 + $0x10] sm:$0xff]
        %v216 = vld [vmem:[%s204 + $0x18] sm:$0xff]
        %v217 = vld [vmem:[%s1] sm:$0xff]
        %v218 = vld [vmem:[%s1 + $0x8] sm:$0xff]
        %vm219 = vcmask 130048
        %v221 = vsel %vm219, %v213, 0
        %v224 = vsel %vm219, %v214, 0
        %v227 = vsel %vm219, %v215, 0
        %v230 = vsel %vm219, %v216, 0
        %232 = vmatprep.subr.mxu0 0.0
        %233 = vmatpush1.msra.mxu0 0.0
        %234 = vmatprep.subr.mxu0 0.0
        %235 = vmatpush1.msra.mxu0 0.0
        %236 = vmatprep.subr.mxu0 0.0
        %237 = vmatpush1.msra.mxu0 0.0
        %238 = vmatprep.subr.mxu0 0.0
        %239 = vmatpush1.msra.mxu0 0.0
        %240 = vmatprep.subr.mxu0 0.0
        %241 = vmatpush1.msra.mxu0 0.0
        %242 = vmatprep.subr.mxu0 0.0
        %243 = vmatpush1.msra.mxu0 0.0
        %244 = vmatprep.subr.mxu0 0.0
        %245 = vmatpush1.msra.mxu0 0.0
        %246 = vmatprep.subr.mxu0 0.0
        %247 = vmatpush1.msra.mxu0 0.0
        %248 = vmatprep.subr.mxu0 0.0
        %249 = vmatpush1.msra.mxu0 0.0
        %250 = vmatprep.subr.mxu0 0.0
        %251 = vmatpush1.msra.mxu0 0.0
        %252 = vmatprep.subr.mxu0 0.0
        %253 = vmatpush1.msra.mxu0 0.0
        %254 = vmatprep.subr.mxu0 0.0
        %255 = vmatpush1.msra.mxu0 0.0
        %256 = vmatprep.subr.mxu0 0.0
        %257 = vmatpush1.msra.mxu0 0.0
        %258 = vmatprep.subr.mxu0 0.0
        %259 = vmatpush1.msra.mxu0 0.0
        %260 = vmatprep.subr.mxu0 0.0
        %261 = vmatpush1.msra.mxu0 %v218
        %262 = vmatprep.subr.mxu0 0.0
        %263 = vmatpush1.msra.mxu0 %v217
        %264 = vmatprep.subr.mxu0 0.0
        %265 = vmatpush2.msra.mxu0 0.0
        %266 = vmatprep.subr.mxu0 0.0
        %267 = vmatpush2.msra.mxu0 0.0
        %268 = vmatprep.subr.mxu0 0.0
        %269 = vmatpush2.msra.mxu0 0.0
        %270 = vmatprep.subr.mxu0 0.0
        %271 = vmatpush2.msra.mxu0 0.0
        %272 = vmatprep.subr.mxu0 0.0
        %273 = vmatpush2.msra.mxu0 0.0
        %274 = vmatprep.subr.mxu0 0.0
        %275 = vmatpush2.msra.mxu0 0.0
        %276 = vmatprep.subr.mxu0 0.0
        %277 = vmatpush2.msra.mxu0 0.0
        %278 = vmatprep.subr.mxu0 0.0
        %279 = vmatpush2.msra.mxu0 0.0
        %280 = vmatprep.subr.mxu0 0.0
        %281 = vmatpush2.msra.mxu0 0.0
        %282 = vmatprep.subr.mxu0 0.0
        %283 = vmatpush2.msra.mxu0 0.0
        %284 = vmatprep.subr.mxu0 0.0
        %285 = vmatpush2.msra.mxu0 0.0
        %286 = vmatprep.subr.mxu0 0.0
        %287 = vmatpush2.msra.mxu0 0.0
        %288 = vmatprep.subr.mxu0 0.0
        %289 = vmatpush2.msra.mxu0 0.0
        %290 = vmatprep.subr.mxu0 0.0
        %291 = vmatpush2.msra.mxu0 0.0
        %292 = vmatprep.subr.mxu0 0.0
        %293 = vmatpush2.msra.mxu0 0.0
        %294 = vmatprep.subr.mxu0 0.0
        %295 = vmatpush2.msra.mxu0 0.0
        %296 = vmatprep.mubr.f32.mxu0 0.0
        %297 = vmatmul.mubr.f32.gmra.mxu0 %v221
        %v298 = vpop.f32.mrf.mxu0
        %v299 = vadd.f32 0.0, %v298
        %v300 = vpop.f32.mrf.mxu0
        %301 = vmatprep.mubr.f32.mxu0 0.0
        %302 = vmatmul.mubr.f32.gmra.mxu0 %v224
        %v303 = vpop.f32.mrf.mxu0
        %v304 = vadd.f32 0.0, %v303
        %v305 = vpop.f32.mrf.mxu0
        %306 = vmatprep.mubr.f32.mxu0 0.0
        %307 = vmatmul.mubr.f32.gmra.mxu0 %v227
        %v308 = vpop.f32.mrf.mxu0
        %v309 = vadd.f32 0.0, %v308
        %v310 = vpop.f32.mrf.mxu0
        %311 = vmatprep.mubr.f32.mxu0 0.0
        %312 = vmatmul.mubr.f32.gmra.mxu0 %v230
        %v313 = vpop.f32.mrf.mxu0
        %v314 = vadd.f32 0.0, %v313
        %v315 = vpop.f32.mrf.mxu0
        %316 = vdwg.mxu0
        %vm317 = vcmask 523264
        %318 = vst.msk [vmem:[%s192] sm:$0xff] %vm317, %v299
        %319 = vst.msk [vmem:[%s192 + $0x8] sm:$0xff] %vm317, %v304
        %320 = vst.msk [vmem:[%s192 + $0x10] sm:$0xff] %vm317, %v309
        %321 = vst.msk [vmem:[%s192 + $0x18] sm:$0xff] %vm317, %v314
        %v322 = vld [vmem:[%s2] sm:$0xff]
        %v323 = vld [vmem:[%s2 + $0x8] sm:$0xff]
        %324 = vmatprep.subr.mxu0 0.0
        %325 = vmatpush1.msra.mxu0 0.0
        %326 = vmatprep.subr.mxu0 0.0
        %327 = vmatpush1.msra.mxu0 0.0
        %328 = vmatprep.subr.mxu0 0.0
        %329 = vmatpush1.msra.mxu0 0.0
        %330 = vmatprep.subr.mxu0 0.0
        %331 = vmatpush1.msra.mxu0 0.0
        %332 = vmatprep.subr.mxu0 0.0
        %333 = vmatpush1.msra.mxu0 0.0
        %334 = vmatprep.subr.mxu0 0.0
        %335 = vmatpush1.msra.mxu0 0.0
        %336 = vmatprep.subr.mxu0 0.0
        %337 = vmatpush1.msra.mxu0 0.0
        %338 = vmatprep.subr.mxu0 0.0
        %339 = vmatpush1.msra.mxu0 0.0
        %340 = vmatprep.subr.mxu0 0.0
        %341 = vmatpush1.msra.mxu0 0.0
        %342 = vmatprep.subr.mxu0 0.0
        %343 = vmatpush1.msra.mxu0 0.0
        %344 = vmatprep.subr.mxu0 0.0
        %345 = vmatpush1.msra.mxu0 0.0
        %346 = vmatprep.subr.mxu0 0.0
        %347 = vmatpush1.msra.mxu0 0.0
        %348 = vmatprep.subr.mxu0 0.0
        %349 = vmatpush1.msra.mxu0 0.0
        %350 = vmatprep.subr.mxu0 0.0
        %351 = vmatpush1.msra.mxu0 0.0
        %352 = vmatprep.subr.mxu0 0.0
        %353 = vmatpush1.msra.mxu0 %v323
        %354 = vmatprep.subr.mxu0 0.0
        %355 = vmatpush1.msra.mxu0 %v322
        %356 = vmatprep.subr.mxu0 0.0
        %357 = vmatpush2.msra.mxu0 0.0
        %358 = vmatprep.subr.mxu0 0.0
        %359 = vmatpush2.msra.mxu0 0.0
        %360 = vmatprep.subr.mxu0 0.0
        %361 = vmatpush2.msra.mxu0 0.0
        %362 = vmatprep.subr.mxu0 0.0
        %363 = vmatpush2.msra.mxu0 0.0
        %364 = vmatprep.subr.mxu0 0.0
        %365 = vmatpush2.msra.mxu0 0.0
        %366 = vmatprep.subr.mxu0 0.0
        %367 = vmatpush2.msra.mxu0 0.0
        %368 = vmatprep.subr.mxu0 0.0
        %369 = vmatpush2.msra.mxu0 0.0
        %370 = vmatprep.subr.mxu0 0.0
        %371 = vmatpush2.msra.mxu0 0.0
        %372 = vmatprep.subr.mxu0 0.0
        %373 = vmatpush2.msra.mxu0 0.0
        %374 = vmatprep.subr.mxu0 0.0
        %375 = vmatpush2.msra.mxu0 0.0
        %376 = vmatprep.subr.mxu0 0.0
        %377 = vmatpush2.msra.mxu0 0.0
        %378 = vmatprep.subr.mxu0 0.0
        %379 = vmatpush2.msra.mxu0 0.0
        %380 = vmatprep.subr.mxu0 0.0
        %381 = vmatpush2.msra.mxu0 0.0
        %382 = vmatprep.subr.mxu0 0.0
        %383 = vmatpush2.msra.mxu0 0.0
        %384 = vmatprep.subr.mxu0 0.0
        %385 = vmatpush2.msra.mxu0 0.0
        %386 = vmatprep.subr.mxu0 0.0
        %387 = vmatpush2.msra.mxu0 0.0
        %388 = vmatprep.mubr.f32.mxu0 0.0
        %389 = vmatmul.mubr.f32.gmra.mxu0 %v221
        %v390 = vpop.f32.mrf.mxu0
        %v391 = vadd.f32 0.0, %v390
        %v392 = vpop.f32.mrf.mxu0
        %393 = vmatprep.mubr.f32.mxu0 0.0
        %394 = vmatmul.mubr.f32.gmra.mxu0 %v224
        %v395 = vpop.f32.mrf.mxu0
        %v396 = vadd.f32 0.0, %v395
        %v397 = vpop.f32.mrf.mxu0
        %398 = vmatprep.mubr.f32.mxu0 0.0
        %399 = vmatmul.mubr.f32.gmra.mxu0 %v227
        %v400 = vpop.f32.mrf.mxu0
        %v401 = vadd.f32 0.0, %v400
        %v402 = vpop.f32.mrf.mxu0
        %403 = vmatprep.mubr.f32.mxu0 0.0
        %404 = vmatmul.mubr.f32.gmra.mxu0 %v230
        %v405 = vpop.f32.mrf.mxu0
        %v406 = vadd.f32 0.0, %v405
        %v407 = vpop.f32.mrf.mxu0
        %408 = vdwg.mxu0
        %vm409 = vcmask 31744
        %410 = vst.msk [vmem:[%s211] sm:$0xff] %vm409, %v391
        %411 = vst.msk [vmem:[%s211 + $0x8] sm:$0xff] %vm409, %v396
        %412 = vst.msk [vmem:[%s211 + $0x10] sm:$0xff] %vm409, %v401
        %413 = vst.msk [vmem:[%s211 + $0x18] sm:$0xff] %vm409, %v406
        %s414 = sand.u32 %s95, 1
        %s415 = scalar_lea.sflag [#allocation3], %s414
        %s416 = sand.u32 %s95, 1
        %s417 = smul.addr %s416, 32
        %s418 = scalar_lea.vmem [#allocation2], %s417
        %s419 = smul.u32 4, %s19
        %p420 = scmp.lt.s32.totalorder %s419, 7
        %s421 = scalar_select %p420, %s419, 7
        %s422 = smul.addr %s421, 8
        %s423 = scalar_lea.vmem %s4, %s422
        // Predicated region
        $region33: #{tpu_custom_call.1} parent=31 // pred_check
          %p424 = pneg %p105
        $region34: #{tpu_custom_call.1} parent=31 // pred_check_branch
          %426 = sbr.rel (%p424) target = $region36
        $region35: #{tpu_custom_call.1} parent=31 // pred_region
          %s427 = smul.u32 4, %s19
          %s429 = ssub.s32 512, 512
          %430 = vsyncadd %s415, %s429
          %s431 = smul.addr %s427, 128
          %s432 = scalar_lea.hbm %s3, %s431
          %s433 = sshll.u32 %s418, 4
          %s434 = int_to_ptr.vmem [resolvable:$true] %s433
          %439 = dma.vmem_to_hbm [thread:$0]  %s434, 512, %s432, %s415, 128, 128, 8
        $region36: #{tpu_custom_call.1} parent=31 // pred_fallthru
          _
        // Predicated region
        $region37: #{tpu_custom_call.1} parent=31 // pred_check
          %p440 = pneg %p131
        $region38: #{tpu_custom_call.1} parent=31 // pred_check_branch
          %442 = sbr.rel (%p440) target = $region40
        $region39: #{tpu_custom_call.1} parent=31 // pred_region
          %s443 = smul.u32 4, %s19
        $region40: #{tpu_custom_call.1} parent=31 // pred_fallthru
          _
      $region32: #{tpu_custom_call.1} parent=5 // pred_fallthru
        _
      %p444 = scmp.le.s32.totalorder 2, %s14
      // Predicated region
      $region41: #{tpu_custom_call.1} parent=5 // pred_check
        %p445 = pneg %p444
      $region42: #{tpu_custom_call.1} parent=5 // pred_check_branch
        %447 = sbr.rel (%p445) target = $region44
      $region43: #{tpu_custom_call.1} parent=5 // pred_region
        %s448 = ssub.s32 %s14, 2
        // Predicated region
        $region45: #{tpu_custom_call.1} parent=43 // pred_check
          %p449 = pneg %p111
        $region46: #{tpu_custom_call.1} parent=43 // pred_check_branch
          %451 = sbr.rel (%p449) target = $region48
        $region47: #{tpu_custom_call.1} parent=43 // pred_region
          %s452 = sand.u32 %s96, 1
          %s453 = scalar_lea.sflag [#allocation3], %s452
          %s454 = sand.u32 %s96, 1
          %s455 = smul.addr %s454, 32
          %s456 = scalar_lea.vmem [#allocation2], %s455
          %457 = dma.done %s453, 512
        $region48: #{tpu_custom_call.1} parent=43 // pred_fallthru
          _
        // Predicated region
        $region49: #{tpu_custom_call.1} parent=43 // pred_check
          %p458 = pneg %p137
        $region50: #{tpu_custom_call.1} parent=43 // pred_check_branch
          %460 = sbr.rel (%p458) target = $region52
        $region51: #{tpu_custom_call.1} parent=43 // pred_region
          %s461 = smul.u32 4, %s20
          %p462 = scmp.lt.s32.totalorder %s461, 7
          %s463 = scalar_select %p462, %s461, 7
          %s464 = smul.addr %s463, 8
          %s465 = scalar_lea.vmem %s4, %s464
        $region52: #{tpu_custom_call.1} parent=43 // pred_fallthru
          _
      $region44: #{tpu_custom_call.1} parent=5 // pred_fallthru
        _
    $region6: #{tpu_custom_call.1} parent=1 // loop_footer
      %s18 = sadd.s32 1, %s14
    $region7: #{tpu_custom_call.1} parent=1 // loop_footer_branch
      %13 = sbr.rel target = $region3
    $region8: #{tpu_custom_call.1} parent=1 // loop_exit
      _
    %466 = vsyncpa [#allocation3], 1
    %s467 = scalar_lea.sflag [#allocation3], 1
    %468 = vsyncpa %s467, 1

</llo_original>
